<compile_context>
chip_gen: v5e
topology: v5e:2x2
jax: 0.10.0
libtpu: 0.0.40
codegen_flags: <defaults>
</compile_context>

<pallas_src>
import math
import functools

import jax
import jax.numpy as jnp
from jax import lax
from jax.experimental import pallas as pl
from jax.experimental.pallas import tpu as pltpu


# ---------------------------------------------------------------------------
# PE table (same math as the torch __init__)
# ---------------------------------------------------------------------------
def make_position_matrix(d_model: int, max_len: int = 512) -> jnp.ndarray:
    position = jnp.arange(0, max_len, dtype=jnp.float32)[:, None]            # (max_len, 1)
    div_term = jnp.exp(jnp.arange(0, d_model, 2, dtype=jnp.float32)
                       * (-math.log(10000.0) / d_model))                      # (d_model//2,)
    pe = jnp.zeros((max_len, d_model), dtype=jnp.float32)
    pe = pe.at[:, 0::2].set(jnp.sin(position * div_term))
    pe = pe.at[:, 1::2].set(jnp.cos(position * div_term))
    return pe                                                                 # (max_len, d_model)


# ---------------------------------------------------------------------------
# Kernels
# ---------------------------------------------------------------------------
def _pe_add_kernel(x_ref, pe_ref, o_ref):
    # x_ref: (TR, TC), pe_ref: (1, TC)  -> sublane-broadcast add on the VPU.
    y = x_ref[...].astype(jnp.float32) + pe_ref[...].astype(jnp.float32)
    o_ref[...] = y.astype(o_ref.dtype)


def _mix_i32(x):
    # Integer hash (Thomas-Wang style) with only int32 ops; wraps like uint32.
    c = jnp.int32(0x45D9F3B)
    x = (lax.shift_right_logical(x, 16) ^ x) * c
    x = (lax.shift_right_logical(x, 16) ^ x) * c
    x = lax.shift_right_logical(x, 16) ^ x
    return x


def _pe_add_dropout_kernel(seed_ref, x_ref, pe_ref, o_ref, *, rate):
    # Inverted dropout applied to (x + pe).  Per-tile seeding via the global
    # block index keeps grid iterations independent ("parallel" semantics).
    i = pl.program_id(0)
    j = pl.program_id(1)
    block_id = i * pl.num_programs(1) + j

    y = x_ref[...].astype(jnp.float32) + pe_ref[...].astype(jnp.float32)

    # Counter-based hash PRNG (portable across TPU and interpret mode).
    shape = y.shape
    r = lax.broadcasted_iota(jnp.int32, shape, 0)
    c = lax.broadcasted_iota(jnp.int32, shape, 1)
    idx = r * jnp.int32(shape[1]) + c
    key = _mix_i32(seed_ref[0] * jnp.int32(0x3243F6B) + block_id + jnp.int32(1))
    bits = _mix_i32(idx ^ key)

    # Uniform in [0, 1) from the low 23 bits (always non-negative as int32).
    u = (bits & jnp.int32(0x7FFFFF)).astype(jnp.float32) * jnp.float32(1.0 / 8388608.0)
    keep = u >= jnp.float32(rate)
    scale = jnp.float32(1.0 / (1.0 - rate))
    o_ref[...] = jnp.where(keep, y * scale, jnp.float32(0.0)).astype(o_ref.dtype)


# ---------------------------------------------------------------------------
# Wrapper
# ---------------------------------------------------------------------------
_COL_TARGET = 64 * 1024     # f32 elements per column tile (~2 MiB per 8-row block)
_ROW_TARGET = 8


@functools.partial(jax.jit, static_argnames=("training", "dropout_rate"))
def positional_encoding_forward(x, position_matrix, seed,
                                training=False, dropout_rate=0.1):
    """x: (B, S, D); position_matrix: (max_len, D) float32."""
    B, S, D = x.shape
    SD = S * D
    pe2 = position_matrix[:S, :].astype(jnp.float32).reshape(1, SD)           # (1, S*D)
    x2 = x.reshape(B, SD)                                                     # lane-dense 2D

    # Tile choice: full extent when small (always legal), otherwise multiples
    # of (8, 128) that keep double-buffered VMEM use well under 16 MiB.
    tile_c = SD if SD <= _COL_TARGET else _COL_TARGET
    tile_r = B if B <= _ROW_TARGET else _ROW_TARGET
    grid = (pl.cdiv(B, tile_r), pl.cdiv(SD, tile_c))

    out_shape = jax.ShapeDtypeStruct((B, SD), x.dtype)
    params = pltpu.CompilerParams(dimension_semantics=("parallel", "parallel"))

    if not training or dropout_rate == 0.0:
        out2 = pl.pallas_call(
            _pe_add_kernel,
            out_shape=out_shape,
            grid_spec=pltpu.PrefetchScalarGridSpec(
                num_scalar_prefetch=0,
                grid=grid,
                in_specs=[pl.BlockSpec((tile_r, tile_c), lambda i, j: (i, j)),
                          pl.BlockSpec((1, tile_c), lambda i, j: (0, j))],
                out_specs=pl.BlockSpec((tile_r, tile_c), lambda i, j: (i, j)),
            ),
            compiler_params=params,
        )(x2, pe2)
        return out2.reshape(B, S, D)

    # Training path with inverted dropout (valid for 0 <= rate < 1).
    rate = float(dropout_rate)
    seed_arr = jnp.reshape(jnp.asarray(seed, dtype=jnp.int32), (1,))
    kern = functools.partial(_pe_add_dropout_kernel, rate=rate)
    out2 = pl.pallas_call(
        kern,
        out_shape=out_shape,
        grid_spec=pltpu.PrefetchScalarGridSpec(
            num_scalar_prefetch=1,
            grid=grid,
            in_specs=[pl.BlockSpec((tile_r, tile_c), lambda i, j, seed: (i, j)),
                      pl.BlockSpec((1, tile_c), lambda i, j, seed: (0, j))],
            out_specs=pl.BlockSpec((tile_r, tile_c), lambda i, j, seed: (i, j)),
        ),
        compiler_params=params,
    )(seed_arr, x2, pe2)
    return out2.reshape(B, S, D)


# ---------------------------------------------------------------------------
# Main
# ---------------------------------------------------------------------------
if __name__ == "__main__":
    d_model = 32
    max_len = 512
    batch = 2
    seq_len = 8
    drop = 0.1

    key = jax.random.PRNGKey(0)
    x = jax.random.normal(key, (batch, seq_len, d_model), dtype=jnp.float32)

    pe_table = make_position_matrix(d_model, max_len)
    ref = x + pe_table[None, :seq_len, :]

    # Eval-mode forward (dropout is identity), matching module.eval() semantics.
    out = positional_encoding_forward(x, pe_table, seed=0,
                                      training=False, dropout_rate=drop)
    out = jax.block_until_ready(out)
    assert out.shape == (batch, seq_len, d_model)
    assert jnp.allclose(out, ref, atol=1e-6), "eval-path mismatch vs reference"

    # Training/dropout path: every element must be 0 or (x + pe) / (1 - rate).
    out_train = positional_encoding_forward(x, pe_table, seed=123,
                                            training=True, dropout_rate=drop)
    out_train = jax.block_until_ready(out_train)
    assert out_train.shape == (batch, seq_len, d_model)
    scaled = ref / (1.0 - drop)
    ok = jnp.isclose(out_train, 0.0, atol=1e-6) | jnp.isclose(out_train, scaled, atol=1e-5)
    assert bool(jnp.all(ok)), "dropout-path values are not {0, (x+pe)/(1-p)}"

    print("KERNEL_OK")
</pallas_src>

<mosaic_0001>
module attributes {stable_mosaic.version = 11 : i64} {
  func.func @_pe_add_kernel(%arg0: i32, %arg1: i32, %arg2: memref<2x256xf32, #tpu.memory_space<vmem>>, %arg3: memref<1x256xf32, #tpu.memory_space<vmem>>, %arg4: memref<2x256xf32, #tpu.memory_space<vmem>>) attributes {dimension_semantics = [#tpu.dimension_semantics<parallel>, #tpu.dimension_semantics<parallel>], iteration_bounds = array<i64: 1, 1>, scalar_prefetch = 0 : i64, scratch_operands = 0 : i64, tpu.core_type = #tpu.core_type<tc>, window_params = [{transform_indices = @transform_0, window_bounds = array<i64: 2, 256>}, {transform_indices = @transform_1, window_bounds = array<i64: 1, 256>}, {transform_indices = @transform_2, window_bounds = array<i64: 2, 256>}]} {
    %c0 = arith.constant 0 : index
    %c0_0 = arith.constant 0 : index
    %0 = vector.load %arg2[%c0, %c0_0] : memref<2x256xf32, #tpu.memory_space<vmem>>, vector<2x256xf32>
    %c0_1 = arith.constant 0 : index
    %c0_2 = arith.constant 0 : index
    %1 = vector.load %arg3[%c0_1, %c0_2] : memref<1x256xf32, #tpu.memory_space<vmem>>, vector<1x256xf32>
    %2 = vector.broadcast %1 : vector<1x256xf32> to vector<2x256xf32>
    %3 = arith.addf %0, %2 : vector<2x256xf32>
    %c0_3 = arith.constant 0 : index
    %c0_4 = arith.constant 0 : index
    %4 = vector.load %arg4[%c0_3, %c0_4] : memref<2x256xf32, #tpu.memory_space<vmem>>, vector<2x256xf32>
    tpu.vector_store %arg4[%c0_3, %c0_4], %3 {strides = array<i32>} : memref<2x256xf32, #tpu.memory_space<vmem>>, vector<2x256xf32>,
    return
  }
  func.func @transform_0(%arg0: i32, %arg1: i32) -> (i32, i32) {
    %c0_i32 = arith.constant 0 : i32
    return %arg0, %arg1 : i32, i32
  }
  func.func @transform_1(%arg0: i32, %arg1: i32) -> (i32, i32) {
    %c0_i32 = arith.constant 0 : i32
    %c0_i32_0 = arith.constant 0 : i32
    return %c0_i32, %arg1 : i32, i32
  }
  func.func @transform_2(%arg0: i32, %arg1: i32) -> (i32, i32) {
    %c0_i32 = arith.constant 0 : i32
    return %arg0, %arg1 : i32, i32
  }
}

</mosaic_0001>

<llo_original>
// kernel: positional_encoding_forward.1
$region0: #{positional_encoding_forward.1}
  #allocation0 [shape = 'u32[]', space=smem, size = 0x4, offset = 0x4, fixed_abs, tag = 'smem constant byte address 0x4 - core index']
  #allocation1 [shape = 'u32[72,128]{1,0:T(1,128)}', space=vmem, size = 0x9000, scoped, tag = 'internal scratch']
  %s0 = inlined_call_operand.vmem [shape: f32[2,256], index: 0, kind: input, shape index: {}]
  %s1 = inlined_call_operand.vmem [shape: f32[1,256], index: 1, kind: input, shape index: {}]
  %s2 = inlined_call_operand.vmem [shape: f32[2,256], index: 2, kind: output, shape index: {}]
  %s3 = sld [smem:[#allocation0]]
  $region18: #{positional_encoding_forward.1} parent=0
    _
  %s5 = ssub.s32 1, %s3
  %s6 = scalar_select 0, %s5, %s3
  // Predicated region
  $region2: #{positional_encoding_forward.1} parent=0 // pred_check
    _
  $region3: #{positional_encoding_forward.1} parent=0 // pred_check_branch
    %8 = sbr.rel (0) target = $region5
  $region4: #{positional_encoding_forward.1} parent=0 // pred_region
    _
  $region5: #{positional_encoding_forward.1} parent=0 // pred_fallthru
    _
  // Predicated region
  $region6: #{positional_encoding_forward.1} parent=0 // pred_check
    _
  $region7: #{positional_encoding_forward.1} parent=0 // pred_check_branch
    %10 = sbr.rel (0) target = $region9
  $region8: #{positional_encoding_forward.1} parent=0 // pred_region
    _
  $region9: #{positional_encoding_forward.1} parent=0 // pred_fallthru
    _
  %v11 = vld [vmem:[%s0] sm:$0xf]
  %v12 = vld [vmem:[%s1] sm:$0x3]
  %v14 = vperm.slane %v12, 0
  %v15 = vperm.slane %v12, 1
  %v16 = vrot.slane %v15, 6
  %vm17 = vcmask 1041408
  %v18 = vsel %vm17, %v14, %v16
  %v20 = vadd.f32 %v11, %v18
  %21 = vst [vmem:[%s2] sm:$0xf] %v20
  // Predicated region
  $region10: #{positional_encoding_forward.1} parent=0 // pred_check
    _
  $region11: #{positional_encoding_forward.1} parent=0 // pred_check_branch
    %23 = sbr.rel (0) target = $region13
  $region12: #{positional_encoding_forward.1} parent=0 // pred_region
    _
  $region13: #{positional_encoding_forward.1} parent=0 // pred_fallthru
    _
  // Predicated region
  $region14: #{positional_encoding_forward.1} parent=0 // pred_check
    _
  $region15: #{positional_encoding_forward.1} parent=0 // pred_check_branch
    %25 = sbr.rel (0) target = $region17
  $region16: #{positional_encoding_forward.1} parent=0 // pred_region
    _
  $region17: #{positional_encoding_forward.1} parent=0 // pred_fallthru
    _

</llo_original>
